<compile_context>
chip_gen: v5e
topology: v5e:2x2
jax: 0.10.0
libtpu: 0.0.40
codegen_flags: <defaults>
</compile_context>

<pallas_src>
import numpy as np

import jax
import jax.numpy as jnp
from jax import lax
from jax.experimental import pallas as pl
from jax.experimental.pallas import tpu as pltpu

# ---- network dimensions (from the PyTorch module) ---------------------------
IN_V, IN_E = 3, 2          # vertex features, edge features
H1, H2, OUT = 50, 20, 1    # Linear(5,50) -> Linear(50,20) -> Linear(20,1)
N_TILE = 128               # vertex tile (lane width of all activations)
X_ROWS = 8                 # layer-1 input rows: 3 vert + 2 agg + 1 ones + 2 pad


def _round_up(x, m):
    return (x + m - 1) // m * m


# ---- packed-weight layout (single VMEM buffer, one DMA, resident) -----------
ROW_W1 = 0                               # rows [0:50)  : [W1v.T | W1e.T | b1 | 0]
ROW_W2 = _round_up(H1, 8)                # rows [56:76) : [W2.T | b2]
ROW_W3 = ROW_W2 + _round_up(H2, 8)       # rows [80:81) : [W3.T | b3]
PACK_ROWS = _round_up(ROW_W3 + OUT, 8)   # 88
PACK_COLS = max(X_ROWS, H1 + 1, H2 + 1)  # 51


def pack_params(params):
    """Pack (w1,b1,w2,b2,w3,b3) into one padded [PACK_ROWS, PACK_COLS] f32 buffer.

    Weights are stored [in, out]; the kernel works in transposed layout
    (W.T @ x.T), so transposes are stored.  b1 sits in column 5 of the layer-1
    block and is folded via the ones row of xt; columns 6,7 stay zero.
    """
    w1, b1, w2, b2, w3, b3 = params
    pack = jnp.zeros((PACK_ROWS, PACK_COLS), jnp.float32)
    pack = pack.at[ROW_W1:ROW_W1 + H1, 0:IN_V + IN_E].set(w1.T)   # [50, 5]
    pack = pack.at[ROW_W1:ROW_W1 + H1, IN_V + IN_E].set(b1)       # col 5 = b1
    pack = pack.at[ROW_W2:ROW_W2 + H2, 0:H1].set(w2.T)            # [20, 50]
    pack = pack.at[ROW_W2:ROW_W2 + H2, H1].set(b2)                # col 50 = b2
    pack = pack.at[ROW_W3:ROW_W3 + OUT, 0:H2].set(w3.T)           # [1, 20]
    pack = pack.at[ROW_W3:ROW_W3 + OUT, H2].set(b3)               # col 20 = b3
    return pack


# ---- one-time graph preprocessing (per topology, host side) -----------------
def prepare_graph(edgeij_pair, num_vertices, n_tile=N_TILE):
    """Sort edges by target vertex and bucket them per vertex tile.

    Returns static window size E_WIN (max edges per tile, rounded to 128),
    per-edge slab slots, per-tile counts (for scalar prefetch), and the sort
    order — reusable across forward passes with the same edgeij_pair.
    """
    tgt = np.asarray(edgeij_pair)[1].astype(np.int32)          # [E]
    num_edges = int(tgt.shape[0])
    n_tiles = max(1, -(-num_vertices // n_tile))
    tile_of_edge = tgt // n_tile                               # [E]
    counts = np.bincount(tile_of_edge, minlength=n_tiles).astype(np.int32)
    e_win = int(_round_up(max(int(counts.max()), 1), 128))     # static window
    order = np.argsort(tile_of_edge, kind="stable").astype(np.int32)
    starts = np.zeros(n_tiles, np.int64)
    starts[1:] = np.cumsum(counts.astype(np.int64))[:-1]
    sorted_tile = tile_of_edge[order].astype(np.int64)
    rank = np.arange(num_edges, dtype=np.int64) - starts[sorted_tile]
    slot = (sorted_tile * e_win + rank).astype(np.int32)       # slab position
    return {
        "n_tiles": n_tiles,
        "e_win": e_win,
        "order": order,
        "slot": slot,
        "tgt_sorted": tgt[order],
        "counts": counts,
    }


# ---- kernel ------------------------------------------------------------------
def vertex_update_kernel(cnt_ref, vert_ref, edge_ref, tgt_ref, pack_ref,
                         out_ref, xt_ref):
    # cnt_ref : SMEM [n_tiles] int32   (scalar prefetch: real edges per tile)
    # vert_ref: VMEM [IN_V, N_TILE] f32 vertex features, feature-major
    # edge_ref: VMEM [IN_E, E_WIN] bf16 this tile's bucketed edge features
    # tgt_ref : VMEM [E_WIN, 1]   int32 global target ids (-1 = padding)
    # pack_ref: VMEM [PACK_ROWS, PACK_COLS] f32 packed weights (resident)
    # out_ref : VMEM [1, N_TILE]  f32   lane-dense output block
    # xt_ref  : VMEM scratch [X_ROWS, N_TILE] f32 layer-1 input [vert;agg;1;pad]
    i = pl.program_id(0)
    e_win = tgt_ref.shape[0]
    n_tile = out_ref.shape[1]

    # ---- assemble xt = [vert ; agg ; 1 ; 1] (rows 6,7 hit zero weight cols) --
    xt_ref[0:IN_V, :] = vert_ref[...]
    xt_ref[IN_V:IN_V + IN_E, :] = jnp.zeros((IN_E, n_tile), jnp.float32)
    xt_ref[IN_V + IN_E:X_ROWS, :] = jnp.ones((X_ROWS - IN_V - IN_E, n_tile),
                                             jnp.float32)

    # ---- edge aggregation: per-tile one-hot scatter-matmul (bf16 -> f32) ----
    @pl.when(cnt_ref[i] > 0)
    def _():
        v_ids = (lax.broadcasted_iota(jnp.int32, (e_win, n_tile), 1)
                 + i * n_tile)                                  # global vertex id
        onehot = (v_ids == tgt_ref[...]).astype(jnp.bfloat16)   # [E_WIN, N_TILE]
        xt_ref[IN_V:IN_V + IN_E, :] = jnp.dot(
            edge_ref[...], onehot, preferred_element_type=jnp.float32)

    # ---- MLP in transposed layout (all results lane-dense over vertices) ----
    x_t = xt_ref[...]                                           # [8, N_TILE]
    w1 = pack_ref[ROW_W1:ROW_W1 + H1, 0:X_ROWS]                 # [50, 8] (b1 folded)
    h1 = jnp.maximum(jnp.dot(w1, x_t, preferred_element_type=jnp.float32), 0.0)

    w2 = pack_ref[ROW_W2:ROW_W2 + H2, 0:H1]                     # [20, 50]
    b2 = pack_ref[ROW_W2:ROW_W2 + H2, H1:H1 + 1]                # [20, 1]
    h2 = jnp.maximum(jnp.dot(w2, h1, preferred_element_type=jnp.float32) + b2,
                     0.0)

    w3 = pack_ref[ROW_W3:ROW_W3 + OUT, 0:H2]                    # [1, 20]
    b3 = pack_ref[ROW_W3:ROW_W3 + OUT, H2:H2 + 1]               # [1, 1]
    out_ref[...] = jnp.dot(w3, h2, preferred_element_type=jnp.float32) + b3


# ---- pallas wrapper ----------------------------------------------------------
@jax.jit
def _vertex_update_call(counts, vert_t, edge_slab, tgt_slab, packed):
    n_tiles = counts.shape[0]
    n_pad = vert_t.shape[1]
    e_win = edge_slab.shape[1] // n_tiles

    grid_spec = pltpu.PrefetchScalarGridSpec(
        num_scalar_prefetch=1,
        grid=(n_tiles,),
        in_specs=[
            pl.BlockSpec((IN_V, N_TILE), lambda i, cnt: (0, i)),        # vertices
            pl.BlockSpec((IN_E, e_win), lambda i, cnt: (0, i)),         # edge slab
            pl.BlockSpec((e_win, 1), lambda i, cnt: (i, 0)),            # targets
            pl.BlockSpec((PACK_ROWS, PACK_COLS), lambda i, cnt: (0, 0)),  # weights
        ],
        out_specs=pl.BlockSpec((1, N_TILE), lambda i, cnt: (0, i)),
        scratch_shapes=[pltpu.VMEM((X_ROWS, N_TILE), jnp.float32)],
    )
    return pl.pallas_call(
        vertex_update_kernel,
        out_shape=jax.ShapeDtypeStruct((1, n_pad), jnp.float32),
        grid_spec=grid_spec,
        compiler_params=pltpu.CompilerParams(
            dimension_semantics=("parallel",)),   # 2 TCs on v7x; harmless elsewhere
    )(counts, vert_t, edge_slab, tgt_slab, packed)


def vertex_update(vertex_attr, edge_attr, graph, packed_params):
    """Pallas-backed VertexUpdate.forward.

    graph = prepare_graph(edgeij_pair, N)   (reused across calls)
    packed_params = pack_params(params)     (reused across calls)
    """
    num_vertices = vertex_attr.shape[0]
    n_tiles, e_win = graph["n_tiles"], graph["e_win"]
    n_pad = n_tiles * N_TILE
    slab = n_tiles * e_win

    # Feature-major vertex block, zero-padded to a 128 multiple (tiny relayout;
    # provide feature-major inputs upstream to eliminate even this).
    vert_t = jnp.zeros((IN_V, n_pad), jnp.float32)
    vert_t = vert_t.at[:, :num_vertices].set(
        jnp.asarray(vertex_attr, jnp.float32).T)

    # Bucketed edge slab (feature-major, bf16) and target column (pad = -1).
    edge_sorted = jnp.asarray(edge_attr, jnp.float32)[graph["order"]]   # [E, 2]
    edge_slab = jnp.zeros((IN_E, slab), jnp.bfloat16)
    edge_slab = edge_slab.at[:, graph["slot"]].set(
        edge_sorted.T.astype(jnp.bfloat16))
    tgt_slab = jnp.full((slab, 1), -1, jnp.int32)
    tgt_slab = tgt_slab.at[graph["slot"], 0].set(
        jnp.asarray(graph["tgt_sorted"], jnp.int32))
    counts = jnp.asarray(graph["counts"], jnp.int32)

    out = _vertex_update_call(counts, vert_t, edge_slab, tgt_slab, packed_params)
    return out[0, :num_vertices].reshape(num_vertices, 1)   # PyTorch shape [N, 1]


# ---- params & pure-JAX reference --------------------------------------------
def make_params(key):
    """Matches init_weights: W ~ U[0,1), b = 0.01. Stored as [in, out]."""
    k1, k2, k3 = jax.random.split(key, 3)
    w1 = jax.random.uniform(k1, (H1, IN_V + IN_E), jnp.float32).T   # [5, 50]
    b1 = jnp.full((H1,), 0.01, jnp.float32)
    w2 = jax.random.uniform(k2, (H2, H1), jnp.float32).T            # [50, 20]
    b2 = jnp.full((H2,), 0.01, jnp.float32)
    w3 = jax.random.uniform(k3, (OUT, H2), jnp.float32).T           # [20, 1]
    b3 = jnp.full((OUT,), 0.01, jnp.float32)
    return (w1, b1, w2, b2, w3, b3)


def vertex_update_ref(vertex_attr, edgeij_pair, edge_attr, params):
    """Pure-JAX f32 reference (segment-sum aggregation + MLP)."""
    w1, b1, w2, b2, w3, b3 = params
    N = vertex_attr.shape[0]
    agg = jax.ops.segment_sum(edge_attr, edgeij_pair[1], num_segments=N)
    x = jnp.concatenate([vertex_attr, agg], axis=1)
    h1 = jnp.maximum(x @ w1 + b1, 0.0)
    h2 = jnp.maximum(h1 @ w2 + b2, 0.0)
    return h2 @ w3 + b3


if __name__ == "__main__":
    key = jax.random.PRNGKey(0)
    k_v, k_e, k_idx, k_p = jax.random.split(key, 4)

    N, E = 200, 512                                   # 2 vertex tiles, small graph
    vertex_attr = jax.random.uniform(k_v, (N, IN_V), jnp.float32)
    edge_attr = jax.random.uniform(k_e, (E, IN_E), jnp.float32)
    edgeij_pair = jax.random.randint(k_idx, (2, E), 0, N, jnp.int32)

    params = make_params(k_p)
    packed = pack_params(params)                      # pack once, reuse
    graph = prepare_graph(edgeij_pair, N)             # once per graph topology

    out = vertex_update(vertex_attr, edge_attr, graph, packed)
    out = jax.block_until_ready(out)

    ref = vertex_update_ref(vertex_attr, edgeij_pair, edge_attr, params)
    assert out.shape == (N, 1)
    max_abs = float(jnp.max(jnp.abs(out - ref)))
    # bf16 edge operand in the scatter matmul -> ~0.2% relative rounding;
    # outputs are O(100), so a 2% relative tolerance is still a tight check.
    assert jnp.allclose(out, ref, rtol=2e-2, atol=1e-1), (
        f"max abs diff = {max_abs}")
    print("KERNEL_OK")
</pallas_src>

<mosaic_0001>
module attributes {stable_mosaic.version = 11 : i64} {
  func.func @vertex_update_kernel(%arg0: i32, %arg1: memref<2xi32, #tpu.memory_space<smem>>, %arg2: memref<3x128xf32, #tpu.memory_space<vmem>>, %arg3: memref<2x384xbf16, #tpu.memory_space<vmem>>, %arg4: memref<384x1xi32, #tpu.memory_space<vmem>>, %arg5: memref<88x51xf32, #tpu.memory_space<vmem>>, %arg6: memref<1x128xf32, #tpu.memory_space<vmem>>, %arg7: memref<8x128xf32, #tpu.memory_space<vmem>>) attributes {dimension_semantics = [#tpu.dimension_semantics<parallel>], iteration_bounds = array<i64: 2>, scalar_prefetch = 1 : i64, scratch_operands = 1 : i64, tpu.core_type = #tpu.core_type<tc>, window_params = [{transform_indices = @transform_0, window_bounds = array<i64: 3, 128>}, {transform_indices = @transform_1, window_bounds = array<i64: 2, 384>}, {transform_indices = @transform_2, window_bounds = array<i64: 384, 1>}, {pipeline_mode = #tpu.pipeline_mode<synchronous>, transform_indices = @transform_3, window_bounds = array<i64: 88, 51>}, {transform_indices = @transform_4, window_bounds = array<i64: 1, 128>}]} {
    %c0 = arith.constant 0 : index
    %c0_0 = arith.constant 0 : index
    %0 = vector.load %arg2[%c0, %c0_0] : memref<3x128xf32, #tpu.memory_space<vmem>>, vector<3x128xf32>
    %c0_1 = arith.constant 0 : index
    %c0_2 = arith.constant 0 : index
    %1 = vector.load %arg7[%c0_1, %c0_2] : memref<8x128xf32, #tpu.memory_space<vmem>>, vector<3x128xf32>
    tpu.vector_store %arg7[%c0_1, %c0_2], %0 {strides = array<i32>} : memref<8x128xf32, #tpu.memory_space<vmem>>, vector<3x128xf32>,
    %cst = arith.constant 0.000000e+00 : f32
    %2 = vector.broadcast %cst : f32 to vector<2x128xf32>
    %c3 = arith.constant 3 : index
    %c0_3 = arith.constant 0 : index
    %3 = vector.load %arg7[%c3, %c0_3] : memref<8x128xf32, #tpu.memory_space<vmem>>, vector<2x128xf32>
    tpu.vector_store %arg7[%c3, %c0_3], %2 {strides = array<i32>} : memref<8x128xf32, #tpu.memory_space<vmem>>, vector<2x128xf32>,
    %cst_4 = arith.constant 1.000000e+00 : f32
    %4 = vector.broadcast %cst_4 : f32 to vector<3x128xf32>
    %c5 = arith.constant 5 : index
    %c0_5 = arith.constant 0 : index
    %5 = vector.load %arg7[%c5, %c0_5] : memref<8x128xf32, #tpu.memory_space<vmem>>, vector<3x128xf32>
    tpu.vector_store %arg7[%c5, %c0_5], %4 {strides = array<i32>} : memref<8x128xf32, #tpu.memory_space<vmem>>, vector<3x128xf32>,
    %6 = arith.index_cast %arg0 : i32 to index
    %7 = memref.load %arg1[%6] : memref<2xi32, #tpu.memory_space<smem>>
    %c0_i32 = arith.constant 0 : i32
    %8 = arith.cmpi sgt, %7, %c0_i32 : i32
    %9 = arith.extui %8 : i1 to i32
    %c0_i32_6 = arith.constant 0 : i32
    %10 = arith.cmpi ne, %9, %c0_i32_6 : i32
    scf.if %10 {
      %29 = tpu.iota {dimensions = array<i32: 1>} : vector<384x128xi32>
      %c128_i32 = arith.constant 128 : i32
      %30 = arith.muli %arg0, %c128_i32 : i32
      %31 = vector.broadcast %30 : i32 to vector<384x128xi32>
      %32 = arith.addi %29, %31 : vector<384x128xi32>
      %c0_22 = arith.constant 0 : index
      %c0_23 = arith.constant 0 : index
      %33 = vector.load %arg4[%c0_22, %c0_23] : memref<384x1xi32, #tpu.memory_space<vmem>>, vector<384x1xi32>
      %34 = vector.broadcast %33 : vector<384x1xi32> to vector<384x128xi32>
      %35 = arith.cmpi eq, %32, %34 : vector<384x128xi32>
      %36 = arith.extui %35 : vector<384x128xi1> to vector<384x128xi32>
      %37 = arith.sitofp %36 : vector<384x128xi32> to vector<384x128xf32>
      %38 = arith.truncf %37 : vector<384x128xf32> to vector<384x128xbf16>
      %c0_24 = arith.constant 0 : index
      %c0_25 = arith.constant 0 : index
      %39 = vector.load %arg3[%c0_24, %c0_25] : memref<2x384xbf16, #tpu.memory_space<vmem>>, vector<2x384xbf16>
      %cst_26 = arith.constant dense<0.000000e+00> : vector<2x128xf32>
      %40 = tpu.matmul %39, %38, %cst_26 {dimension_numbers = #tpu.dot_dimension_numbers<[1], [0], [0], [1], [0, 0, 1, 1], [], []>} : vector<2x384xbf16>, vector<384x128xbf16>, vector<2x128xf32> -> vector<2x128xf32>
      %c3_27 = arith.constant 3 : index
      %c0_28 = arith.constant 0 : index
      %41 = vector.load %arg7[%c3_27, %c0_28] : memref<8x128xf32, #tpu.memory_space<vmem>>, vector<2x128xf32>
      tpu.vector_store %arg7[%c3_27, %c0_28], %40 {strides = array<i32>} : memref<8x128xf32, #tpu.memory_space<vmem>>, vector<2x128xf32>,
    } else {
    }
    %c0_7 = arith.constant 0 : index
    %c0_8 = arith.constant 0 : index
    %11 = vector.load %arg7[%c0_7, %c0_8] : memref<8x128xf32, #tpu.memory_space<vmem>>, vector<8x128xf32>
    %c0_9 = arith.constant 0 : index
    %c0_10 = arith.constant 0 : index
    %12 = vector.load %arg5[%c0_9, %c0_10] : memref<88x51xf32, #tpu.memory_space<vmem>>, vector<50x8xf32>
    %cst_11 = arith.constant dense<0.000000e+00> : vector<50x128xf32>
    %13 = tpu.matmul %12, %11, %cst_11 {dimension_numbers = #tpu.dot_dimension_numbers<[1], [0], [0], [1], [0, 0, 1, 1], [], []>} : vector<50x8xf32>, vector<8x128xf32>, vector<50x128xf32> -> vector<50x128xf32>
    %cst_12 = arith.constant 0.000000e+00 : f32
    %14 = vector.broadcast %cst_12 : f32 to vector<50x128xf32>
    %15 = arith.maximumf %13, %14 : vector<50x128xf32>
    %c56 = arith.constant 56 : index
    %c0_13 = arith.constant 0 : index
    %16 = vector.load %arg5[%c56, %c0_13] : memref<88x51xf32, #tpu.memory_space<vmem>>, vector<20x50xf32>
    %c56_14 = arith.constant 56 : index
    %c50 = arith.constant 50 : index
    %17 = vector.load %arg5[%c56_14, %c50] : memref<88x51xf32, #tpu.memory_space<vmem>>, vector<20x1xf32>
    %cst_15 = arith.constant dense<0.000000e+00> : vector<20x128xf32>
    %18 = tpu.matmul %16, %15, %cst_15 {dimension_numbers = #tpu.dot_dimension_numbers<[1], [0], [0], [1], [0, 0, 1, 1], [], []>} : vector<20x50xf32>, vector<50x128xf32>, vector<20x128xf32> -> vector<20x128xf32>
    %19 = vector.broadcast %17 : vector<20x1xf32> to vector<20x128xf32>
    %20 = arith.addf %18, %19 : vector<20x128xf32>
    %cst_16 = arith.constant 0.000000e+00 : f32
    %21 = vector.broadcast %cst_16 : f32 to vector<20x128xf32>
    %22 = arith.maximumf %20, %21 : vector<20x128xf32>
    %c80 = arith.constant 80 : index
    %c0_17 = arith.constant 0 : index
    %23 = vector.load %arg5[%c80, %c0_17] : memref<88x51xf32, #tpu.memory_space<vmem>>, vector<1x20xf32>
    %c80_18 = arith.constant 80 : index
    %c20 = arith.constant 20 : index
    %24 = vector.load %arg5[%c80_18, %c20] : memref<88x51xf32, #tpu.memory_space<vmem>>, vector<1x1xf32>
    %cst_19 = arith.constant dense<0.000000e+00> : vector<1x128xf32>
    %25 = tpu.matmul %23, %22, %cst_19 {dimension_numbers = #tpu.dot_dimension_numbers<[1], [0], [0], [1], [0, 0, 1, 1], [], []>} : vector<1x20xf32>, vector<20x128xf32>, vector<1x128xf32> -> vector<1x128xf32>
    %26 = vector.broadcast %24 : vector<1x1xf32> to vector<1x128xf32>
    %27 = arith.addf %25, %26 : vector<1x128xf32>
    %c0_20 = arith.constant 0 : index
    %c0_21 = arith.constant 0 : index
    %28 = vector.load %arg6[%c0_20, %c0_21] : memref<1x128xf32, #tpu.memory_space<vmem>>, vector<1x128xf32>
    tpu.vector_store %arg6[%c0_20, %c0_21], %27 {strides = array<i32>} : memref<1x128xf32, #tpu.memory_space<vmem>>, vector<1x128xf32>,
    return
  }
  func.func @transform_0(%arg0: i32, %arg1: memref<2xi32, #tpu.memory_space<smem>>) -> (i32, i32) {
    %c0_i32 = arith.constant 0 : i32
    %c0_i32_0 = arith.constant 0 : i32
    return %c0_i32, %arg0 : i32, i32
  }
  func.func @transform_1(%arg0: i32, %arg1: memref<2xi32, #tpu.memory_space<smem>>) -> (i32, i32) {
    %c0_i32 = arith.constant 0 : i32
    %c0_i32_0 = arith.constant 0 : i32
    return %c0_i32, %arg0 : i32, i32
  }
  func.func @transform_2(%arg0: i32, %arg1: memref<2xi32, #tpu.memory_space<smem>>) -> (i32, i32) {
    %c0_i32 = arith.constant 0 : i32
    %c0_i32_0 = arith.constant 0 : i32
    return %arg0, %c0_i32 : i32, i32
  }
  func.func @transform_3(%arg0: i32, %arg1: memref<2xi32, #tpu.memory_space<smem>>) -> (i32, i32) {
    %c0_i32 = arith.constant 0 : i32
    %c0_i32_0 = arith.constant 0 : i32
    %c0_i32_1 = arith.constant 0 : i32
    return %c0_i32, %c0_i32_0 : i32, i32
  }
  func.func @transform_4(%arg0: i32, %arg1: memref<2xi32, #tpu.memory_space<smem>>) -> (i32, i32) {
    %c0_i32 = arith.constant 0 : i32
    %c0_i32_0 = arith.constant 0 : i32
    return %c0_i32, %arg0 : i32, i32
  }
}

</mosaic_0001>

<llo_original>
// kernel: _vertex_update_call.1
$region0: #{_vertex_update_call.1}
  #allocation0 [shape = 'u32[]', space=smem, size = 0x4, offset = 0x4, fixed_abs, tag = 'smem constant byte address 0x4 - core index']
  #allocation1 [shape = 'u32[72,128]{1,0:T(1,128)}', space=vmem, size = 0x9000, scoped, tag = 'internal scratch']
  #allocation2 [shape = 'f32[8,128]{1,0:T(8,128)}', space=vmem, size = 0x1000, scoped, tag = 'scratch operand']
  #allocation3 [shape = 's32[1]{0}', space=sflag, size = 0x4, scoped, tag = 'scoped memory for _vertex_update_call.1']
  #allocation4 [shape = 'u8[512]{0}', space=smem, size = 0x200, scoped, tag = 'prefetched SMEM operand 0']
  %s0 = inlined_call_operand.vmem [shape: s32[2], index: 0, kind: input, shape index: {}]
  %s1 = inlined_call_operand.vmem [shape: f32[3,256], index: 1, kind: input, shape index: {}]
  %s2 = inlined_call_operand.vmem [shape: bf16[2,768], index: 2, kind: input, shape index: {}]
  %s3 = inlined_call_operand.vmem [shape: s32[768,1], index: 3, kind: input, shape index: {}]
  %s4 = inlined_call_operand.vmem [shape: f32[88,51], index: 4, kind: input, shape index: {}]
  %s5 = inlined_call_operand.hbm [shape: f32[1,256], index: 5, kind: output, shape index: {}]
  %s6 = sld [smem:[#allocation0]]
  $region53: #{_vertex_update_call.1} parent=0
    _
  %s8 = ssub.s32 1, %s6
  %s9 = scalar_select 0, %s8, %s6
  %s11 = sshll.u32 %s0, 4
  %s12 = int_to_ptr.vmem [resolvable:$true] %s11
  %14 = dma.vmem_to_smem %s12, 16, [#allocation4], [#allocation3]
  %16 = dma.done [#allocation3], 16
  %17 = sfence
  $region1: #{_vertex_update_call.1} parent=0
    #allocation5 [shape = 'u8[1024]{0}', space=vmem, size = 0x400, scoped, tag = 'output window, operand 0']
    #allocation6 [shape = 's32[2]{0}', space=sflag, size = 0x8, scoped, tag = 'scoped memory for _vertex_update_call.1']
    %18 = vsyncpa [#allocation6], 0
    %s19 = scalar_lea.sflag [#allocation6], 1
    %20 = vsyncpa %s19, 0
    loop: start=0, step=1, limit=4
    $region2: #{_vertex_update_call.1} parent=1 // loop_pre_header
      _
    $region3: #{_vertex_update_call.1} parent=1 // loop_header
      %s22 = sphi 0, %s26
      %p23 = scmp.ge.s32.totalorder %s22, 4
      %s32 = sphi 0, %s34
      %s35 = sphi 0, %s32
      %s36 = sphi 0, %s35
      %s52 = sphi 0, %s36
      %s58 = sphi 0, %s60
      %s61 = sphi 0, %s58
      %s62 = sphi 0, %s61
      %s78 = sphi 0, %s62
      %s84 = sphi 0, %s86
      %s87 = sphi 0, %s84
      %s88 = sphi 0, %s87
      %s104 = sphi 0, %s88
      %s108 = sphi 0, %s108
      %s110 = sphi 0, %s108
      %s111 = sphi 0, %s110
      %s125 = sphi 0, %s111
      %s131 = sphi 0, %s133
      %s134 = sphi 0, %s131
      %s135 = sphi 0, %s134
      %s151 = sphi 0, %s135
    $region4: #{_vertex_update_call.1} parent=1 // loop_header_branch
      %25 = sbr.rel (%p23) target = $region8
    $region5: #{_vertex_update_call.1} parent=1 // loop_body
      %s27 = ssub.s32 %s22, 1
      %s28 = ssub.s32 %s22, 2
      %s29 = sadd.s32 %s22, 1
      %s30 = ssub.s32 %s22, %s29
      %p31 = scmp.eq.s32.totalorder %s30, 0
      %s33 = sadd.s32 %s32, 1
      %s34 = scalar_select %p31, %s32, %s33
      %p37 = pneg %p31
      %p38 = scmp.eq.s32.totalorder %s22, 1
      %p39 = por %p37, %p38
      %p40 = scmp.ne.s32.totalorder %s32, %s35
      %p41 = scmp.eq.s32.totalorder %s22, 0
      %p42 = por %p40, %p41
      %p43 = scmp.ne.s32.totalorder %s32, %s35
      %p44 = scmp.eq.s32.totalorder %s27, 1
      %p45 = por %p43, %p44
      %p46 = scmp.ne.s32.totalorder %s35, %s36
      %p47 = scmp.eq.s32.totalorder %s27, 0
      %p48 = por %p46, %p47
      %p49 = scmp.ne.s32.totalorder %s35, %s36
      %p50 = scmp.eq.s32.totalorder %s28, 1
      %p51 = por %p49, %p50
      %p53 = scmp.ne.s32.totalorder %s36, %s52
      %p54 = scmp.eq.s32.totalorder %s28, 0
      %p55 = por %p53, %p54
      %s56 = ssub.s32 %s22, %s29
      %p57 = scmp.eq.s32.totalorder %s56, 0
      %s59 = sadd.s32 %s58, 1
      %s60 = scalar_select %p57, %s58, %s59
      %p63 = pneg %p57
      %p64 = scmp.eq.s32.totalorder %s22, 1
      %p65 = por %p63, %p64
      %p66 = scmp.ne.s32.totalorder %s58, %s61
      %p67 = scmp.eq.s32.totalorder %s22, 0
      %p68 = por %p66, %p67
      %p69 = scmp.ne.s32.totalorder %s58, %s61
      %p70 = scmp.eq.s32.totalorder %s27, 1
      %p71 = por %p69, %p70
      %p72 = scmp.ne.s32.totalorder %s61, %s62
      %p73 = scmp.eq.s32.totalorder %s27, 0
      %p74 = por %p72, %p73
      %p75 = scmp.ne.s32.totalorder %s61, %s62
      %p76 = scmp.eq.s32.totalorder %s28, 1
      %p77 = por %p75, %p76
      %p79 = scmp.ne.s32.totalorder %s62, %s78
      %p80 = scmp.eq.s32.totalorder %s28, 0
      %p81 = por %p79, %p80
      %s82 = ssub.s32 %s22, %s29
      %p83 = scmp.eq.s32.totalorder %s82, 0
      %s85 = sadd.s32 %s84, 1
      %s86 = scalar_select %p83, %s84, %s85
      %p89 = pneg %p83
      %p90 = scmp.eq.s32.totalorder %s22, 1
      %p91 = por %p89, %p90
      %p92 = scmp.ne.s32.totalorder %s84, %s87
      %p93 = scmp.eq.s32.totalorder %s22, 0
      %p94 = por %p92, %p93
      %p95 = scmp.ne.s32.totalorder %s84, %s87
      %p96 = scmp.eq.s32.totalorder %s27, 1
      %p97 = por %p95, %p96
      %p98 = scmp.ne.s32.totalorder %s87, %s88
      %p99 = scmp.eq.s32.totalorder %s27, 0
      %p100 = por %p98, %p99
      %p101 = scmp.ne.s32.totalorder %s87, %s88
      %p102 = scmp.eq.s32.totalorder %s28, 1
      %p103 = por %p101, %p102
      %p105 = scmp.ne.s32.totalorder %s88, %s104
      %p106 = scmp.eq.s32.totalorder %s28, 0
      %p107 = por %p105, %p106
      %s109 = sadd.s32 %s108, 1
      %p112 = scmp.eq.s32.totalorder %s22, 1
      %p113 = scmp.ne.s32.totalorder %s108, %s110
      %p114 = scmp.eq.s32.totalorder %s22, 0
      %p115 = por %p113, %p114
      %p116 = scmp.ne.s32.totalorder %s108, %s110
      %p117 = scmp.eq.s32.totalorder %s27, 1
      %p118 = por %p116, %p117
      %p119 = scmp.ne.s32.totalorder %s110, %s111
      %p120 = scmp.eq.s32.totalorder %s27, 0
      %p121 = por %p119, %p120
      %p122 = scmp.ne.s32.totalorder %s110, %s111
      %p123 = scmp.eq.s32.totalorder %s28, 1
      %p124 = por %p122, %p123
      %p126 = scmp.ne.s32.totalorder %s111, %s125
      %p127 = scmp.eq.s32.totalorder %s28, 0
      %p128 = por %p126, %p127
      %s129 = ssub.s32 %s22, %s29
      %p130 = scmp.eq.s32.totalorder %s129, 0
      %s132 = sadd.s32 %s131, 1
      %s133 = scalar_select %p130, %s131, %s132
      %p136 = pneg %p130
      %p137 = scmp.eq.s32.totalorder %s22, 1
      %p138 = por %p136, %p137
      %p139 = scmp.ne.s32.totalorder %s131, %s134
      %p140 = scmp.eq.s32.totalorder %s22, 0
      %p141 = por %p139, %p140
      %p142 = scmp.ne.s32.totalorder %s131, %s134
      %p143 = scmp.eq.s32.totalorder %s27, 1
      %p144 = por %p142, %p143
      %p145 = scmp.ne.s32.totalorder %s134, %s135
      %p146 = scmp.eq.s32.totalorder %s27, 0
      %p147 = por %p145, %p146
      %p148 = scmp.ne.s32.totalorder %s134, %s135
      %p149 = scmp.eq.s32.totalorder %s28, 1
      %p150 = por %p148, %p149
      %p152 = scmp.ne.s32.totalorder %s135, %s151
      %p153 = scmp.eq.s32.totalorder %s28, 0
      %p154 = por %p152, %p153
      %p155 = scmp.le.s32.totalorder 1, %s22
      %p156 = scmp.lt.s32.totalorder %s22, 3
      %p157 = pnand %p155, %p156
      %p158 = pneg %p157
      // Predicated region
      $region9: #{_vertex_update_call.1} parent=5 // pred_check
        _
      $region10: #{_vertex_update_call.1} parent=5 // pred_check_branch
        %160 = sbr.rel (%p157) target = $region12
      $region11: #{_vertex_update_call.1} parent=5 // pred_region
        %s161 = ssub.s32 %s22, 1
        // Predicated region
        $region13: #{_vertex_update_call.1} parent=11 // pred_check
          %p162 = pneg %p121
        $region14: #{_vertex_update_call.1} parent=11 // pred_check_branch
          %164 = sbr.rel (%p162) target = $region16
        $region15: #{_vertex_update_call.1} parent=11 // pred_region
          _
        $region16: #{_vertex_update_call.1} parent=11 // pred_fallthru
          _
      $region12: #{_vertex_update_call.1} parent=5 // pred_fallthru
        _
      %p165 = scmp.lt.s32.totalorder %s22, 2
      // Predicated region
      $region17: #{_vertex_update_call.1} parent=5 // pred_check
        %p166 = pneg %p165
      $region18: #{_vertex_update_call.1} parent=5 // pred_check_branch
        %168 = sbr.rel (%p166) target = $region20
      $region19: #{_vertex_update_call.1} parent=5 // pred_region
        // Predicated region
        $region21: #{_vertex_update_call.1} parent=19 // pred_check
          %p169 = pneg %p42
        $region22: #{_vertex_update_call.1} parent=19 // pred_check_branch
          %171 = sbr.rel (%p169) target = $region24
        $region23: #{_vertex_update_call.1} parent=19 // pred_region
          %p172 = scmp.lt.s32.totalorder %s22, 1
          %s173 = scalar_select %p172, %s22, 1
          %s174 = smul.addr %s173, 4
          %s175 = scalar_lea.vmem %s1, %s174
        $region24: #{_vertex_update_call.1} parent=19 // pred_fallthru
          _
        // Predicated region
        $region25: #{_vertex_update_call.1} parent=19 // pred_check
          %p176 = pneg %p68
        $region26: #{_vertex_update_call.1} parent=19 // pred_check_branch
          %178 = sbr.rel (%p176) target = $region28
        $region27: #{_vertex_update_call.1} parent=19 // pred_region
          %s179 = smul.u32 3, %s22
          %p180 = scmp.lt.s32.totalorder %s179, 5
          %s181 = scalar_select %p180, %s179, 5
          %s182 = scalar_lea.vmem %s2, %s181
          %s183 = smul.u32 3, %s22
        $region28: #{_vertex_update_call.1} parent=19 // pred_fallthru
          _
        // Predicated region
        $region29: #{_vertex_update_call.1} parent=19 // pred_check
          %p184 = pneg %p94
        $region30: #{_vertex_update_call.1} parent=19 // pred_check_branch
          %186 = sbr.rel (%p184) target = $region32
        $region31: #{_vertex_update_call.1} parent=19 // pred_region
          %s187 = smul.u32 48, %s22
          %p188 = scmp.lt.s32.totalorder %s187, 95
          %s189 = scalar_select %p188, %s187, 95
          %s190 = smul.addr %s189, 8
          %s191 = scalar_lea.vmem %s3, %s190
          %s192 = smul.u32 48, %s22
        $region32: #{_vertex_update_call.1} parent=19 // pred_fallthru
          _
      $region20: #{_vertex_update_call.1} parent=5 // pred_fallthru
        _
      %p193 = scmp.le.s32.totalorder 1, %s22
      %p194 = scmp.lt.s32.totalorder %s22, 3
      %p195 = pnand %p193, %p194
      %p196 = pneg %p195
      // Predicated region
      $region33: #{_vertex_update_call.1} parent=5 // pred_check
        _
      $region34: #{_vertex_update_call.1} parent=5 // pred_check_branch
        %198 = sbr.rel (%p195) target = $region36
      $region35: #{_vertex_update_call.1} parent=5 // pred_region
        %s199 = ssub.s32 %s22, 1
        %p200 = scmp.lt.s32.totalorder %s27, 1
        %s201 = scalar_select %p200, %s27, 1
        %s202 = smul.addr %s201, 4
        %s203 = scalar_lea.vmem %s1, %s202
        %p204 = pneg %p48
        %p205 = pneg %p45
        %s206 = smul.u32 3, %s27
        %p207 = scmp.lt.s32.totalorder %s206, 5
        %s208 = scalar_select %p207, %s206, 5
        %s209 = scalar_lea.vmem %s2, %s208
        %p210 = pneg %p74
        %p211 = pneg %p71
        %s212 = smul.u32 48, %s27
        %p213 = scmp.lt.s32.totalorder %s212, 95
        %s214 = scalar_select %p213, %s212, 95
        %s215 = smul.addr %s214, 8
        %s216 = scalar_lea.vmem %s3, %s215
        %p217 = pneg %p100
        %p218 = pneg %p97
        %p219 = pneg %p121
        %p220 = pneg %p118
        %p221 = pneg %p147
        %p222 = pneg %p144
        %s223 = sand.u32 %s134, 1
        %s224 = scalar_lea.sflag [#allocation6], %s223
        %s225 = sand.u32 %s134, 1
        %s226 = scalar_lea.vmem [#allocation5], %s225
        %p227 = scmp.lt.s32.totalorder %s27, 1
        %s228 = scalar_select %p227, %s27, 1
        %s229 = smul.addr %s228, 4
        %s230 = scalar_lea.vmem %s1, %s229
        %s231 = smul.u32 3, %s27
        %p232 = scmp.lt.s32.totalorder %s231, 5
        %s233 = scalar_select %p232, %s231, 5
        %s234 = scalar_lea.vmem %s2, %s233
        %s235 = smul.u32 3, %s27
        %s236 = smul.u32 48, %s27
        %p237 = scmp.lt.s32.totalorder %s236, 95
        %s238 = scalar_select %p237, %s236, 95
        %s239 = smul.addr %s238, 8
        %s240 = scalar_lea.vmem %s3, %s239
        %s241 = smul.u32 48, %s27
        %v242 = vld [vmem:[%s230] sm:$0x7]
        %243 = vst [vmem:[#allocation2] sm:$0x7] %v242
        %244 = vst [vmem:[#allocation2 + $0x3] sm:$0x3] 0.0
        %245 = vst [vmem:[#allocation2 + $0x5] sm:$0x7] 1.0
        %s246 = sld [smem:[#allocation4 + %s27]]
        %p247 = scmp.gt.s32.totalorder %s246, 0
        // Predicated region
        $region37: #{_vertex_update_call.1} parent=35 // pred_check
          %p248 = pneg %p247
        $region38: #{_vertex_update_call.1} parent=35 // pred_check_branch
          %250 = sbr.rel (%p248) target = $region40
        $region39: #{_vertex_update_call.1} parent=35 // pred_region
          %v251 = vlaneseq
          %v252 = vand.u32 %v251, 127
          %s253 = smul.u32 %s27, 128
          %v254 = vstv %s253
          %v255 = vadd.s32 %v252, %v254
          %v256 = vld [vmem:[%s240] sm:$0xff]
          %v257 = vld [vmem:[%s240 + $0x8] sm:$0xff]
          %v258 = vld [vmem:[%s240 + $0x10] sm:$0xff]
          %v259 = vld [vmem:[%s240 + $0x18] sm:$0xff]
          %v260 = vld [vmem:[%s240 + $0x20] sm:$0xff]
          %v261 = vld [vmem:[%s240 + $0x28] sm:$0xff]
          %v262 = vld [vmem:[%s240 + $0x30] sm:$0xff]
          %v263 = vld [vmem:[%s240 + $0x38] sm:$0xff]
          %v264 = vld [vmem:[%s240 + $0x40] sm:$0xff]
          %v265 = vld [vmem:[%s240 + $0x48] sm:$0xff]
          %v266 = vld [vmem:[%s240 + $0x50] sm:$0xff]
          %v267 = vld [vmem:[%s240 + $0x58] sm:$0xff]
          %v268 = vld [vmem:[%s240 + $0x60] sm:$0xff]
          %v269 = vld [vmem:[%s240 + $0x68] sm:$0xff]
          %v270 = vld [vmem:[%s240 + $0x70] sm:$0xff]
          %v271 = vld [vmem:[%s240 + $0x78] sm:$0xff]
          %v272 = vld [vmem:[%s240 + $0x80] sm:$0xff]
          %v273 = vld [vmem:[%s240 + $0x88] sm:$0xff]
          %v274 = vld [vmem:[%s240 + $0x90] sm:$0xff]
          %v275 = vld [vmem:[%s240 + $0x98] sm:$0xff]
          %v276 = vld [vmem:[%s240 + $0xa0] sm:$0xff]
          %v277 = vld [vmem:[%s240 + $0xa8] sm:$0xff]
          %v278 = vld [vmem:[%s240 + $0xb0] sm:$0xff]
          %v279 = vld [vmem:[%s240 + $0xb8] sm:$0xff]
          %v280 = vld [vmem:[%s240 + $0xc0] sm:$0xff]
          %v281 = vld [vmem:[%s240 + $0xc8] sm:$0xff]
          %v282 = vld [vmem:[%s240 + $0xd0] sm:$0xff]
          %v283 = vld [vmem:[%s240 + $0xd8] sm:$0xff]
          %v284 = vld [vmem:[%s240 + $0xe0] sm:$0xff]
          %v285 = vld [vmem:[%s240 + $0xe8] sm:$0xff]
          %v286 = vld [vmem:[%s240 + $0xf0] sm:$0xff]
          %v287 = vld [vmem:[%s240 + $0xf8] sm:$0xff]
          %v288 = vld [vmem:[%s240 + $0x100] sm:$0xff]
          %v289 = vld [vmem:[%s240 + $0x108] sm:$0xff]
          %v290 = vld [vmem:[%s240 + $0x110] sm:$0xff]
          %v291 = vld [vmem:[%s240 + $0x118] sm:$0xff]
          %v292 = vld [vmem:[%s240 + $0x120] sm:$0xff]
          %v293 = vld [vmem:[%s240 + $0x128] sm:$0xff]
          %v294 = vld [vmem:[%s240 + $0x130] sm:$0xff]
          %v295 = vld [vmem:[%s240 + $0x138] sm:$0xff]
          %v296 = vld [vmem:[%s240 + $0x140] sm:$0xff]
          %v297 = vld [vmem:[%s240 + $0x148] sm:$0xff]
          %v298 = vld [vmem:[%s240 + $0x150] sm:$0xff]
          %v299 = vld [vmem:[%s240 + $0x158] sm:$0xff]
          %v300 = vld [vmem:[%s240 + $0x160] sm:$0xff]
          %v301 = vld [vmem:[%s240 + $0x168] sm:$0xff]
          %v302 = vld [vmem:[%s240 + $0x170] sm:$0xff]
          %v303 = vld [vmem:[%s240 + $0x178] sm:$0xff]
          %304 = vset.pattern.permute.xlu0 0
          %305 = vperm.xlu0 %304, %v256
          %v306 = vpop.permute.xlu0 %305
          %307 = vset.pattern.permute.xlu0 0
          %308 = vperm.xlu0 %307, %v257
          %v309 = vpop.permute.xlu0 %308
          %310 = vset.pattern.permute.xlu0 0
          %311 = vperm.xlu0 %310, %v258
          %v312 = vpop.permute.xlu0 %311
          %313 = vset.pattern.permute.xlu0 0
          %314 = vperm.xlu0 %313, %v259
          %v315 = vpop.permute.xlu0 %314
          %316 = vset.pattern.permute.xlu0 0
          %317 = vperm.xlu0 %316, %v260
          %v318 = vpop.permute.xlu0 %317
          %319 = vset.pattern.permute.xlu0 0
          %320 = vperm.xlu0 %319, %v261
          %v321 = vpop.permute.xlu0 %320
          %322 = vset.pattern.permute.xlu0 0
          %323 = vperm.xlu0 %322, %v262
          %v324 = vpop.permute.xlu0 %323
          %325 = vset.pattern.permute.xlu0 0
          %326 = vperm.xlu0 %325, %v263
          %v327 = vpop.permute.xlu0 %326
          %328 = vset.pattern.permute.xlu0 0
          %329 = vperm.xlu0 %328, %v264
          %v330 = vpop.permute.xlu0 %329
          %331 = vset.pattern.permute.xlu0 0
          %332 = vperm.xlu0 %331, %v265
          %v333 = vpop.permute.xlu0 %332
          %334 = vset.pattern.permute.xlu0 0
          %335 = vperm.xlu0 %334, %v266
          %v336 = vpop.permute.xlu0 %335
          %337 = vset.pattern.permute.xlu0 0
          %338 = vperm.xlu0 %337, %v267
          %v339 = vpop.permute.xlu0 %338
          %340 = vset.pattern.permute.xlu0 0
          %341 = vperm.xlu0 %340, %v268
          %v342 = vpop.permute.xlu0 %341
          %343 = vset.pattern.permute.xlu0 0
          %344 = vperm.xlu0 %343, %v269
          %v345 = vpop.permute.xlu0 %344
          %346 = vset.pattern.permute.xlu0 0
          %347 = vperm.xlu0 %346, %v270
          %v348 = vpop.permute.xlu0 %347
          %349 = vset.pattern.permute.xlu0 0
          %350 = vperm.xlu0 %349, %v271
          %v351 = vpop.permute.xlu0 %350
          %352 = vset.pattern.permute.xlu0 0
          %353 = vperm.xlu0 %352, %v272
          %v354 = vpop.permute.xlu0 %353
          %355 = vset.pattern.permute.xlu0 0
          %356 = vperm.xlu0 %355, %v273
          %v357 = vpop.permute.xlu0 %356
          %358 = vset.pattern.permute.xlu0 0
          %359 = vperm.xlu0 %358, %v274
          %v360 = vpop.permute.xlu0 %359
          %361 = vset.pattern.permute.xlu0 0
          %362 = vperm.xlu0 %361, %v275
          %v363 = vpop.permute.xlu0 %362
          %364 = vset.pattern.permute.xlu0 0
          %365 = vperm.xlu0 %364, %v276
          %v366 = vpop.permute.xlu0 %365
          %367 = vset.pattern.permute.xlu0 0
          %368 = vperm.xlu0 %367, %v277
          %v369 = vpop.permute.xlu0 %368
          %370 = vset.pattern.permute.xlu0 0
          %371 = vperm.xlu0 %370, %v278
          %v372 = vpop.permute.xlu0 %371
          %373 = vset.pattern.permute.xlu0 0
          %374 = vperm.xlu0 %373, %v279
          %v375 = vpop.permute.xlu0 %374
          %376 = vset.pattern.permute.xlu0 0
          %377 = vperm.xlu0 %376, %v280
          %v378 = vpop.permute.xlu0 %377
          %379 = vset.pattern.permute.xlu0 0
          %380 = vperm.xlu0 %379, %v281
          %v381 = vpop.permute.xlu0 %380
          %382 = vset.pattern.permute.xlu0 0
          %383 = vperm.xlu0 %382, %v282
          %v384 = vpop.permute.xlu0 %383
          %385 = vset.pattern.permute.xlu0 0
          %386 = vperm.xlu0 %385, %v283
          %v387 = vpop.permute.xlu0 %386
          %388 = vset.pattern.permute.xlu0 0
          %389 = vperm.xlu0 %388, %v284
          %v390 = vpop.permute.xlu0 %389
          %391 = vset.pattern.permute.xlu0 0
          %392 = vperm.xlu0 %391, %v285
          %v393 = vpop.permute.xlu0 %392
          %394 = vset.pattern.permute.xlu0 0
          %395 = vperm.xlu0 %394, %v286
          %v396 = vpop.permute.xlu0 %395
          %397 = vset.pattern.permute.xlu0 0
          %398 = vperm.xlu0 %397, %v287
          %v399 = vpop.permute.xlu0 %398
          %400 = vset.pattern.permute.xlu0 0
          %401 = vperm.xlu0 %400, %v288
          %v402 = vpop.permute.xlu0 %401
          %403 = vset.pattern.permute.xlu0 0
          %404 = vperm.xlu0 %403, %v289
          %v405 = vpop.permute.xlu0 %404
          %406 = vset.pattern.permute.xlu0 0
          %407 = vperm.xlu0 %406, %v290
          %v408 = vpop.permute.xlu0 %407
          %409 = vset.pattern.permute.xlu0 0
          %410 = vperm.xlu0 %409, %v291
          %v411 = vpop.permute.xlu0 %410
          %412 = vset.pattern.permute.xlu0 0
          %413 = vperm.xlu0 %412, %v292
          %v414 = vpop.permute.xlu0 %413
          %415 = vset.pattern.permute.xlu0 0
          %416 = vperm.xlu0 %415, %v293
          %v417 = vpop.permute.xlu0 %416
          %418 = vset.pattern.permute.xlu0 0
          %419 = vperm.xlu0 %418, %v294
          %v420 = vpop.permute.xlu0 %419
          %421 = vset.pattern.permute.xlu0 0
          %422 = vperm.xlu0 %421, %v295
          %v423 = vpop.permute.xlu0 %422
          %424 = vset.pattern.permute.xlu0 0
          %425 = vperm.xlu0 %424, %v296
          %v426 = vpop.permute.xlu0 %425
          %427 = vset.pattern.permute.xlu0 0
          %428 = vperm.xlu0 %427, %v297
          %v429 = vpop.permute.xlu0 %428
          %430 = vset.pattern.permute.xlu0 0
          %431 = vperm.xlu0 %430, %v298
          %v432 = vpop.permute.xlu0 %431
          %433 = vset.pattern.permute.xlu0 0
          %434 = vperm.xlu0 %433, %v299
          %v435 = vpop.permute.xlu0 %434
          %436 = vset.pattern.permute.xlu0 0
          %437 = vperm.xlu0 %436, %v300
          %v438 = vpop.permute.xlu0 %437
          %439 = vset.pattern.permute.xlu0 0
          %440 = vperm.xlu0 %439, %v301
          %v441 = vpop.permute.xlu0 %440
          %442 = vset.pattern.permute.xlu0 0
          %443 = vperm.xlu0 %442, %v302
          %v444 = vpop.permute.xlu0 %443
          %445 = vset.pattern.permute.xlu0 0
          %446 = vperm.xlu0 %445, %v303
          %v447 = vpop.permute.xlu0 %446
          %vm448 = vcmp.eq.s32.totalorder %v255, %v306
          %vm449 = vcmp.eq.s32.totalorder %v255, %v309
          %vm450 = vcmp.eq.s32.totalorder %v255, %v312
          %vm451 = vcmp.eq.s32.totalorder %v255, %v315
          %vm452 = vcmp.eq.s32.totalorder %v255, %v318
          %vm453 = vcmp.eq.s32.totalorder %v255, %v321
          %vm454 = vcmp.eq.s32.totalorder %v255, %v324
          %vm455 = vcmp.eq.s32.totalorder %v255, %v327
          %vm456 = vcmp.eq.s32.totalorder %v255, %v330
          %vm457 = vcmp.eq.s32.totalorder %v255, %v333
          %vm458 = vcmp.eq.s32.totalorder %v255, %v336
          %vm459 = vcmp.eq.s32.totalorder %v255, %v339
          %vm460 = vcmp.eq.s32.totalorder %v255, %v342
          %vm461 = vcmp.eq.s32.totalorder %v255, %v345
          %vm462 = vcmp.eq.s32.totalorder %v255, %v348
          %vm463 = vcmp.eq.s32.totalorder %v255, %v351
          %vm464 = vcmp.eq.s32.totalorder %v255, %v354
          %vm465 = vcmp.eq.s32.totalorder %v255, %v357
          %vm466 = vcmp.eq.s32.totalorder %v255, %v360
          %vm467 = vcmp.eq.s32.totalorder %v255, %v363
          %vm468 = vcmp.eq.s32.totalorder %v255, %v366
          %vm469 = vcmp.eq.s32.totalorder %v255, %v369
          %vm470 = vcmp.eq.s32.totalorder %v255, %v372
          %vm471 = vcmp.eq.s32.totalorder %v255, %v375
          %vm472 = vcmp.eq.s32.totalorder %v255, %v378
          %vm473 = vcmp.eq.s32.totalorder %v255, %v381
          %vm474 = vcmp.eq.s32.totalorder %v255, %v384
          %vm475 = vcmp.eq.s32.totalorder %v255, %v387
          %vm476 = vcmp.eq.s32.totalorder %v255, %v390
          %vm477 = vcmp.eq.s32.totalorder %v255, %v393
          %vm478 = vcmp.eq.s32.totalorder %v255, %v396
          %vm479 = vcmp.eq.s32.totalorder %v255, %v399
          %vm480 = vcmp.eq.s32.totalorder %v255, %v402
          %vm481 = vcmp.eq.s32.totalorder %v255, %v405
          %vm482 = vcmp.eq.s32.totalorder %v255, %v408
          %vm483 = vcmp.eq.s32.totalorder %v255, %v411
          %vm484 = vcmp.eq.s32.totalorder %v255, %v414
          %vm485 = vcmp.eq.s32.totalorder %v255, %v417
          %vm486 = vcmp.eq.s32.totalorder %v255, %v420
          %vm487 = vcmp.eq.s32.totalorder %v255, %v423
          %vm488 = vcmp.eq.s32.totalorder %v255, %v426
          %vm489 = vcmp.eq.s32.totalorder %v255, %v429
          %vm490 = vcmp.eq.s32.totalorder %v255, %v432
          %vm491 = vcmp.eq.s32.totalorder %v255, %v435
          %vm492 = vcmp.eq.s32.totalorder %v255, %v438
          %vm493 = vcmp.eq.s32.totalorder %v255, %v441
          %vm494 = vcmp.eq.s32.totalorder %v255, %v444
          %vm495 = vcmp.eq.s32.totalorder %v255, %v447
          %v496 = vsel %vm448, 1, 0
          %v497 = vsel %vm449, 1, 0
          %v498 = vsel %vm450, 1, 0
          %v499 = vsel %vm451, 1, 0
          %v500 = vsel %vm452, 1, 0
          %v501 = vsel %vm453, 1, 0
          %v502 = vsel %vm454, 1, 0
          %v503 = vsel %vm455, 1, 0
          %v504 = vsel %vm456, 1, 0
          %v505 = vsel %vm457, 1, 0
          %v506 = vsel %vm458, 1, 0
          %v507 = vsel %vm459, 1, 0
          %v508 = vsel %vm460, 1, 0
          %v509 = vsel %vm461, 1, 0
          %v510 = vsel %vm462, 1, 0
          %v511 = vsel %vm463, 1, 0
          %v512 = vsel %vm464, 1, 0
          %v513 = vsel %vm465, 1, 0
          %v514 = vsel %vm466, 1, 0
          %v515 = vsel %vm467, 1, 0
          %v516 = vsel %vm468, 1, 0
          %v517 = vsel %vm469, 1, 0
          %v518 = vsel %vm470, 1, 0
          %v519 = vsel %vm471, 1, 0
          %v520 = vsel %vm472, 1, 0
          %v521 = vsel %vm473, 1, 0
          %v522 = vsel %vm474, 1, 0
          %v523 = vsel %vm475, 1, 0
          %v524 = vsel %vm476, 1, 0
          %v525 = vsel %vm477, 1, 0
          %v526 = vsel %vm478, 1, 0
          %v527 = vsel %vm479, 1, 0
          %v528 = vsel %vm480, 1, 0
          %v529 = vsel %vm481, 1, 0
          %v530 = vsel %vm482, 1, 0
          %v531 = vsel %vm483, 1, 0
          %v532 = vsel %vm484, 1, 0
          %v533 = vsel %vm485, 1, 0
          %v534 = vsel %vm486, 1, 0
          %v535 = vsel %vm487, 1, 0
          %v536 = vsel %vm488, 1, 0
          %v537 = vsel %vm489, 1, 0
          %v538 = vsel %vm490, 1, 0
          %v539 = vsel %vm491, 1, 0
          %v540 = vsel %vm492, 1, 0
          %v541 = vsel %vm493, 1, 0
          %v542 = vsel %vm494, 1, 0
          %v543 = vsel %vm495, 1, 0
          %v544 = vcvt.s32.f32 %v496
          %v545 = vcvt.s32.f32 %v497
          %v546 = vcvt.s32.f32 %v498
          %v547 = vcvt.s32.f32 %v499
          %v548 = vcvt.s32.f32 %v500
          %v549 = vcvt.s32.f32 %v501
          %v550 = vcvt.s32.f32 %v502
          %v551 = vcvt.s32.f32 %v503
          %v552 = vcvt.s32.f32 %v504
          %v553 = vcvt.s32.f32 %v505
          %v554 = vcvt.s32.f32 %v506
          %v555 = vcvt.s32.f32 %v507
          %v556 = vcvt.s32.f32 %v508
          %v557 = vcvt.s32.f32 %v509
          %v558 = vcvt.s32.f32 %v510
          %v559 = vcvt.s32.f32 %v511
          %v560 = vcvt.s32.f32 %v512
          %v561 = vcvt.s32.f32 %v513
          %v562 = vcvt.s32.f32 %v514
          %v563 = vcvt.s32.f32 %v515
          %v564 = vcvt.s32.f32 %v516
          %v565 = vcvt.s32.f32 %v517
          %v566 = vcvt.s32.f32 %v518
          %v567 = vcvt.s32.f32 %v519
          %v568 = vcvt.s32.f32 %v520
          %v569 = vcvt.s32.f32 %v521
          %v570 = vcvt.s32.f32 %v522
          %v571 = vcvt.s32.f32 %v523
          %v572 = vcvt.s32.f32 %v524
          %v573 = vcvt.s32.f32 %v525
          %v574 = vcvt.s32.f32 %v526
          %v575 = vcvt.s32.f32 %v527
          %v576 = vcvt.s32.f32 %v528
          %v577 = vcvt.s32.f32 %v529
          %v578 = vcvt.s32.f32 %v530
          %v579 = vcvt.s32.f32 %v531
          %v580 = vcvt.s32.f32 %v532
          %v581 = vcvt.s32.f32 %v533
          %v582 = vcvt.s32.f32 %v534
          %v583 = vcvt.s32.f32 %v535
          %v584 = vcvt.s32.f32 %v536
          %v585 = vcvt.s32.f32 %v537
          %v586 = vcvt.s32.f32 %v538
          %v587 = vcvt.s32.f32 %v539
          %v588 = vcvt.s32.f32 %v540
          %v589 = vcvt.s32.f32 %v541
          %v590 = vcvt.s32.f32 %v542
          %v591 = vcvt.s32.f32 %v543
          %v592 = vpack.c.bf16 %v545, %v544
          %v593 = vpack.c.bf16 %v547, %v546
          %v594 = vpack.c.bf16 %v549, %v548
          %v595 = vpack.c.bf16 %v551, %v550
          %v596 = vpack.c.bf16 %v553, %v552
          %v597 = vpack.c.bf16 %v555, %v554
          %v598 = vpack.c.bf16 %v557, %v556
          %v599 = vpack.c.bf16 %v559, %v558
          %v600 = vpack.c.bf16 %v561, %v560
          %v601 = vpack.c.bf16 %v563, %v562
          %v602 = vpack.c.bf16 %v565, %v564
          %v603 = vpack.c.bf16 %v567, %v566
          %v604 = vpack.c.bf16 %v569, %v568
          %v605 = vpack.c.bf16 %v571, %v570
          %v606 = vpack.c.bf16 %v573, %v572
          %v607 = vpack.c.bf16 %v575, %v574
          %v608 = vpack.c.bf16 %v577, %v576
          %v609 = vpack.c.bf16 %v579, %v578
          %v610 = vpack.c.bf16 %v581, %v580
          %v611 = vpack.c.bf16 %v583, %v582
          %v612 = vpack.c.bf16 %v585, %v584
          %v613 = vpack.c.bf16 %v587, %v586
          %v614 = vpack.c.bf16 %v589, %v588
          %v615 = vpack.c.bf16 %v591, %v590
          %v616 = vld [vmem:[%s234] sm:$0x7]
          %618 = vst [vmem:[#allocation1] ss:$9 sm:$0xff] %v616
          %v619 = vld [vmem:[#allocation1] sm:$0xff]
          %v620 = vld [vmem:[#allocation1 + $0x9] sm:$0xff]
          %v621 = vld [vmem:[#allocation1 + $0x12] sm:$0xff]
          %625 = vmatpush.bf16.msra.mxu0 %v599
          %626 = vmatpush.bf16.msra.mxu0 %v598
          %627 = vmatpush.bf16.msra.mxu0 %v597
          %628 = vmatpush.bf16.msra.mxu0 %v596
          %629 = vmatpush.bf16.msra.mxu0 %v595
          %630 = vmatpush.bf16.msra.mxu0 %v594
          %631 = vmatpush.bf16.msra.mxu0 %v593
          %632 = vmatpush.bf16.msra.mxu0 %v592
          %633 = vmatmul.bf16.gmra.mxu0 %v619
          %v634 = vpop.f32.mrf.mxu0
          %v635 = vadd.f32 0.0, %v634
          %v636 = vpop.f32.mrf.mxu0
          %637 = vdwg.mxu0
          %638 = vmatpush.bf16.msra.mxu0 %v607
          %639 = vmatpush.bf16.msra.mxu0 %v606
          %640 = vmatpush.bf16.msra.mxu0 %v605
          %641 = vmatpush.bf16.msra.mxu0 %v604
          %642 = vmatpush.bf16.msra.mxu0 %v603
          %643 = vmatpush.bf16.msra.mxu0 %v602
          %644 = vmatpush.bf16.msra.mxu0 %v601
          %645 = vmatpush.bf16.msra.mxu0 %v600
          %646 = vmatmul.bf16.gmra.mxu0 %v620
          %v647 = vpop.f32.mrf.mxu0
          %v648 = vadd.f32 %v635, %v647
          %v649 = vpop.f32.mrf.mxu0
          %650 = vdwg.mxu0
          %651 = vmatpush.bf16.msra.mxu0 %v615
          %652 = vmatpush.bf16.msra.mxu0 %v614
          %653 = vmatpush.bf16.msra.mxu0 %v613
          %654 = vmatpush.bf16.msra.mxu0 %v612
          %655 = vmatpush.bf16.msra.mxu0 %v611
          %656 = vmatpush.bf16.msra.mxu0 %v610
          %657 = vmatpush.bf16.msra.mxu0 %v609
          %658 = vmatpush.bf16.msra.mxu0 %v608
          %659 = vmatmul.bf16.gmra.mxu0 %v621
          %v660 = vpop.f32.mrf.mxu0
          %v661 = vadd.f32 %v648, %v660
          %v662 = vpop.f32.mrf.mxu0
          %663 = vdwg.mxu0
          %664 = vst [vmem:[#allocation2 + $0x3] sm:$0x3] %v661
        $region40: #{_vertex_update_call.1} parent=35 // pred_fallthru
          _
        %v665 = vld [vmem:[#allocation2] sm:$0xff]
        %v666 = vld [vmem:[%s4] sm:$0xff]
        %v667 = vld [vmem:[%s4 + $0x8] sm:$0xff]
        %v668 = vld [vmem:[%s4 + $0x10] sm:$0xff]
        %v669 = vld [vmem:[%s4 + $0x18] sm:$0xff]
        %v670 = vld [vmem:[%s4 + $0x20] sm:$0xff]
        %v671 = vld [vmem:[%s4 + $0x28] sm:$0xff]
        %v672 = vld [vmem:[%s4 + $0x30] sm:$0x3]
        %vm673 = vcmask 64512
        %v675 = vsel %vm673, %v666, 0
        %v678 = vsel %vm673, %v667, 0
        %v681 = vsel %vm673, %v668, 0
        %v684 = vsel %vm673, %v669, 0
        %v687 = vsel %vm673, %v670, 0
        %v690 = vsel %vm673, %v671, 0
        %v693 = vsel %vm673, %v672, 0
        %695 = vmatpush.msra.mxu0 0.0
        %696 = vmatpush.msra.mxu0 0.0
        %697 = vmatpush.msra.mxu0 0.0
        %698 = vmatpush.msra.mxu0 0.0
        %699 = vmatpush.msra.mxu0 0.0
        %700 = vmatpush.msra.mxu0 0.0
        %701 = vmatpush.msra.mxu0 0.0
        %702 = vmatpush.msra.mxu0 0.0
        %703 = vmatpush.msra.mxu0 0.0
        %704 = vmatpush.msra.mxu0 0.0
        %705 = vmatpush.msra.mxu0 0.0
        %706 = vmatpush.msra.mxu0 0.0
        %707 = vmatpush.msra.mxu0 0.0
        %708 = vmatpush.msra.mxu0 0.0
        %709 = vmatpush.msra.mxu0 0.0
        %710 = vmatpush.msra.mxu0 %v665
        %711 = vmatmul.f32.gmra.mxu0 %v675
        %v712 = vpop.f32.mrf.mxu0
        %v713 = vadd.f32 0.0, %v712
        %714 = vmatmul.f32.gmra.mxu0 %v678
        %v715 = vpop.f32.mrf.mxu0
        %v716 = vadd.f32 0.0, %v715
        %717 = vmatmul.f32.gmra.mxu0 %v681
        %v718 = vpop.f32.mrf.mxu0
        %v719 = vadd.f32 0.0, %v718
        %720 = vmatmul.f32.gmra.mxu0 %v684
        %v721 = vpop.f32.mrf.mxu0
        %v722 = vadd.f32 0.0, %v721
        %723 = vmatmul.f32.gmra.mxu0 %v687
        %v724 = vpop.f32.mrf.mxu0
        %v725 = vadd.f32 0.0, %v724
        %726 = vmatmul.f32.gmra.mxu0 %v690
        %v727 = vpop.f32.mrf.mxu0
        %v728 = vadd.f32 0.0, %v727
        %729 = vmatmul.f32.gmra.mxu0 %v693
        %v730 = vpop.f32.mrf.mxu0
        %v731 = vadd.f32 0.0, %v730
        %732 = vdwg.mxu0
        %v733 = vmax.f32 %v713, 0.0
        %v734 = vmax.f32 %v716, 0.0
        %v735 = vmax.f32 %v719, 0.0
        %v736 = vmax.f32 %v722, 0.0
        %v737 = vmax.f32 %v725, 0.0
        %v738 = vmax.f32 %v728, 0.0
        %v739 = vmax.f32 %v731, 0.0
        %v740 = vld [vmem:[%s4 + $0x38] sm:$0xff]
        %v741 = vld [vmem:[%s4 + $0x40] sm:$0xff]
        %v742 = vld [vmem:[%s4 + $0x48] sm:$0xf]
        %744 = vset.pattern.permute.xlu0 50
        %745 = vperm.xlu0 %744, %v740
        %v746 = vpop.permute.xlu0 %745
        %749 = vset.pattern.permute.xlu0 50
        %750 = vperm.xlu0 %749, %v741
        %v751 = vpop.permute.xlu0 %750
        %754 = vset.pattern.permute.xlu0 50
        %755 = vperm.xlu0 %754, %v742
        %v756 = vpop.permute.xlu0 %755
        %vm758 = vcmask 408576
        %v759 = vsel %vm758, %v740, 0
        %v761 = vsel %vm758, %v741, 0
        %v763 = vsel %vm758, %v742, 0
        %vm765 = vcmask 1041408
        %v767 = vsel %vm765, %v739, 0
        %769 = vmatpush.msra.mxu0 0.0
        %770 = vmatpush.msra.mxu0 0.0
        %771 = vmatpush.msra.mxu0 0.0
        %772 = vmatpush.msra.mxu0 0.0
        %773 = vmatpush.msra.mxu0 0.0
        %774 = vmatpush.msra.mxu0 0.0
        %775 = vmatpush.msra.mxu0 0.0
        %776 = vmatpush.msra.mxu0 0.0
        %777 = vmatpush.msra.mxu0 0.0
        %778 = vmatpush.msra.mxu0 %v767
        %779 = vmatpush.msra.mxu0 %v738
        %780 = vmatpush.msra.mxu0 %v737
        %781 = vmatpush.msra.mxu0 %v736
        %782 = vmatpush.msra.mxu0 %v735
        %783 = vmatpush.msra.mxu0 %v734
        %784 = vmatpush.msra.mxu0 %v733
        %785 = vmatmul.f32.gmra.mxu0 %v759
        %v786 = vpop.f32.mrf.mxu0
        %v787 = vadd.f32 %v746, %v786
        %788 = vmatmul.f32.gmra.mxu0 %v761
        %v789 = vpop.f32.mrf.mxu0
        %v790 = vadd.f32 %v751, %v789
        %791 = vmatmul.f32.gmra.mxu0 %v763
        %v792 = vpop.f32.mrf.mxu0
        %v793 = vadd.f32 %v756, %v792
        %794 = vdwg.mxu0
        %v795 = vmax.f32 %v787, 0.0
        %v796 = vmax.f32 %v790, 0.0
        %v797 = vmax.f32 %v793, 0.0
        %v798 = vld [vmem:[%s4 + $0x50] sm:$0x1]
        %800 = vset.pattern.permute.xlu0 20
        %801 = vperm.xlu0 %800, %v798
        %v802 = vpop.permute.xlu0 %801
        %vm804 = vcmask 162816
        %v805 = vsel %vm804, %v798, 0
        %vm807 = vcmask 1043456
        %v809 = vsel %vm807, %v797, 0
        %811 = vmatpush.msra.mxu0 0.0
        %812 = vmatpush.msra.mxu0 0.0
        %813 = vmatpush.msra.mxu0 0.0
        %814 = vmatpush.msra.mxu0 0.0
        %815 = vmatpush.msra.mxu0 0.0
        %816 = vmatpush.msra.mxu0 0.0
        %817 = vmatpush.msra.mxu0 0.0
        %818 = vmatpush.msra.mxu0 0.0
        %819 = vmatpush.msra.mxu0 0.0
        %820 = vmatpush.msra.mxu0 0.0
        %821 = vmatpush.msra.mxu0 0.0
        %822 = vmatpush.msra.mxu0 0.0
        %823 = vmatpush.msra.mxu0 0.0
        %824 = vmatpush.msra.mxu0 %v809
        %825 = vmatpush.msra.mxu0 %v796
        %826 = vmatpush.msra.mxu0 %v795
        %827 = vmatmul.f32.gmra.mxu0 %v805
        %v828 = vpop.f32.mrf.mxu0
        %v829 = vadd.f32 %v802, %v828
        %830 = vdwg.mxu0
        %831 = vst [vmem:[%s226] sm:$0x1] %v829
        %s832 = sand.u32 %s134, 1
        %s833 = scalar_lea.sflag [#allocation6], %s832
        %s834 = sand.u32 %s134, 1
        %s835 = scalar_lea.vmem [#allocation5], %s834
        // Predicated region
        $region41: #{_vertex_update_call.1} parent=35 // pred_check
          %p836 = pneg %p144
        $region42: #{_vertex_update_call.1} parent=35 // pred_check_branch
          %838 = sbr.rel (%p836) target = $region44
        $region43: #{_vertex_update_call.1} parent=35 // pred_region
          %840 = vsyncadd %s833, 0
          %s841 = scalar_lea.hbm %s5, %s27
          %s843 = sshll.u32 %s835, 4
          %s844 = int_to_ptr.vmem [resolvable:$true] %s843
          %s845 = sshll.u32 %s841, 4
          %s846 = int_to_ptr.hbm [resolvable:$true] %s845
          %848 = dma.vmem_to_hbm [thread:$0]  %s844, 16, %s846, %s833
        $region44: #{_vertex_update_call.1} parent=35 // pred_fallthru
          _
      $region36: #{_vertex_update_call.1} parent=5 // pred_fallthru
        _
      %p849 = scmp.le.s32.totalorder 2, %s22
      // Predicated region
      $region45: #{_vertex_update_call.1} parent=5 // pred_check
        %p850 = pneg %p849
      $region46: #{_vertex_update_call.1} parent=5 // pred_check_branch
        %852 = sbr.rel (%p850) target = $region48
      $region47: #{_vertex_update_call.1} parent=5 // pred_region
        %s853 = ssub.s32 %s22, 2
        // Predicated region
        $region49: #{_vertex_update_call.1} parent=47 // pred_check
          %p854 = pneg %p150
        $region50: #{_vertex_update_call.1} parent=47 // pred_check_branch
          %856 = sbr.rel (%p854) target = $region52
        $region51: #{_vertex_update_call.1} parent=47 // pred_region
          %s857 = sand.u32 %s135, 1
          %s858 = scalar_lea.sflag [#allocation6], %s857
          %s859 = sand.u32 %s135, 1
          %s860 = scalar_lea.vmem [#allocation5], %s859
          %862 = dma.done %s858, 16
        $region52: #{_vertex_update_call.1} parent=47 // pred_fallthru
          _
      $region48: #{_vertex_update_call.1} parent=5 // pred_fallthru
        _
    $region6: #{_vertex_update_call.1} parent=1 // loop_footer
      %s26 = sadd.s32 1, %s22
    $region7: #{_vertex_update_call.1} parent=1 // loop_footer_branch
      %21 = sbr.rel target = $region3
    $region8: #{_vertex_update_call.1} parent=1 // loop_exit
      _
    %863 = vsyncpa [#allocation6], 1
    %s864 = scalar_lea.sflag [#allocation6], 1
    %865 = vsyncpa %s864, 1

</llo_original>
